<compile_context>
chip_gen: v6e
topology: v6e:2x2x1
jax: 0.10.0
libtpu: 0.0.40
codegen_flags: <defaults>
</compile_context>

<pallas_src>
import jax
import jax.numpy as jnp
from jax.experimental import pallas as pl
from jax.experimental.pallas import tpu as pltpu

LANES = 128  # lane width of a vreg


# Packed parameter layout in SMEM (17 f32 scalars):
#   [0:8]   w1 (2,4) row-major : w1[k, j] -> index 4*k + j
#   [8:12]  b1 (4,)
#   [12:16] w2 (4,)
#   [16]    b2 ()
def simplenn_kernel(p_ref, x_ref, o_ref):
    x0 = x_ref[0]                        # (tr, 128) feature 0, dense vregs
    x1 = x_ref[1]                        # (tr, 128) feature 1, dense vregs

    # fc1 + ReLU + fc2, fully unrolled over the 4 hidden units (pure VPU work).
    acc = jnp.full_like(x0, p_ref[16])   # start from fc2 bias
    for j in range(4):
        h_j = jnp.maximum(x0 * p_ref[j] + x1 * p_ref[4 + j] + p_ref[8 + j], 0.0)
        acc = acc + p_ref[12 + j] * h_j

    # sigmoid(y) = 1 / (1 + exp(-y)); exp and approx reciprocal stay on the EUP.
    o_ref[...] = pl.reciprocal(1.0 + jnp.exp(-acc), approx=True).astype(o_ref.dtype)


def _round_up(n, m):
    return ((n + m - 1) // m) * m


def simplenn_forward(x, w1, b1, w2, b2, *, block_rows=256):
    """x: (B, 2) f32.  w1:(2,4) b1:(1,4) w2:(4,1) b2:(1,1) (PyTorch-transposed)."""
    B = x.shape[0]

    # Lane/sublane-dense layout: batch fills lanes (128) and sublanes (rows).
    xt = jnp.asarray(x, jnp.float32).T                        # (2, B)

    # Pack the 17 parameter scalars into one SMEM vector.
    params = jnp.concatenate([
        jnp.asarray(w1, jnp.float32).reshape(-1),             # 8
        jnp.asarray(b1, jnp.float32).reshape(-1),             # 4
        jnp.asarray(w2, jnp.float32).reshape(-1),             # 4
        jnp.asarray(b2, jnp.float32).reshape(-1),             # 1
    ])                                                        # (17,)

    # Row tile: sublane-aligned multiple of 8; shrink for tiny batches.
    n_rows = pl.cdiv(B, LANES)
    tr = min(block_rows, _round_up(n_rows, 8))
    rows_pad = _round_up(n_rows, tr)
    b_pad = rows_pad * LANES
    if b_pad != B:
        xt = jnp.pad(xt, ((0, 0), (0, b_pad - B)))            # zero-pad batch
    x3 = xt.reshape(2, rows_pad, LANES)                       # (2, R, 128)

    out = pl.pallas_call(
        simplenn_kernel,
        out_shape=jax.ShapeDtypeStruct((rows_pad, LANES), jnp.float32),
        grid=(rows_pad // tr,),
        in_specs=[
            pl.BlockSpec(memory_space=pltpu.MemorySpace.SMEM),   # packed params
            pl.BlockSpec((2, tr, LANES), lambda i: (0, i, 0)),   # x batch tile
        ],
        out_specs=pl.BlockSpec((tr, LANES), lambda i: (i, 0)),   # dense out tile
        compiler_params=pltpu.CompilerParams(
            dimension_semantics=("parallel",)),                  # megacore on v7x
    )(params, x3)

    return out.reshape(-1)[:B].reshape(B, 1)


def init_params(key):
    # Match PyTorch nn.Linear default init: U(-1/sqrt(fan_in), 1/sqrt(fan_in)).
    k1, k2, k3, k4 = jax.random.split(key, 4)
    bound1 = 1.0 / jnp.sqrt(2.0)   # fc1: in_features = 2
    bound2 = 1.0 / jnp.sqrt(4.0)   # fc2: in_features = 4
    # Stored already transposed relative to PyTorch's (out, in) convention.
    w1 = jax.random.uniform(k1, (2, 4), jnp.float32, -bound1, bound1)
    b1 = jax.random.uniform(k2, (1, 4), jnp.float32, -bound1, bound1)
    w2 = jax.random.uniform(k3, (4, 1), jnp.float32, -bound2, bound2)
    b2 = jax.random.uniform(k4, (1, 1), jnp.float32, -bound2, bound2)
    return w1, b1, w2, b2


if __name__ == "__main__":
    key = jax.random.PRNGKey(0)
    kx, kp = jax.random.split(key)

    batch = 8
    x = jax.random.normal(kx, (batch, 2), jnp.float32)
    w1, b1, w2, b2 = init_params(kp)

    out = simplenn_forward(x, w1, b1, w2, b2)
    out = jax.block_until_ready(out)

    # Pure-JAX reference check (same math, no Pallas).
    ref = jax.nn.sigmoid(jnp.maximum(x @ w1 + b1, 0.0) @ w2 + b2)
    assert out.shape == (batch, 1)
    # Slightly loose tolerance: kernel uses the EUP approximate reciprocal.
    assert jnp.allclose(out, ref, atol=2e-3, rtol=2e-3)

    print("KERNEL_OK")
</pallas_src>

<mosaic_0001>
module attributes {stable_mosaic.version = 11 : i64} {
  func.func @simplenn_kernel(%arg0: i32, %arg1: memref<17xf32, #tpu.memory_space<smem>>, %arg2: memref<2x8x128xf32, #tpu.memory_space<vmem>>, %arg3: memref<8x128xf32, #tpu.memory_space<vmem>>) attributes {dimension_semantics = [#tpu.dimension_semantics<parallel>], iteration_bounds = array<i64: 1>, scalar_prefetch = 0 : i64, scratch_operands = 0 : i64, tpu.core_type = #tpu.core_type<tc>, window_params = [{transform_indices = @transform_0, window_bounds = array<i64: 17>}, {transform_indices = @transform_1, window_bounds = array<i64: 2, 8, 128>}, {transform_indices = @transform_2, window_bounds = array<i64: 8, 128>}]} {
    %c0 = arith.constant 0 : index
    %c0_0 = arith.constant 0 : index
    %c0_1 = arith.constant 0 : index
    %0 = vector.load %arg2[%c0, %c0_0, %c0_1] : memref<2x8x128xf32, #tpu.memory_space<vmem>>, vector<1x8x128xf32>
    %1 = vector.shape_cast %0 : vector<1x8x128xf32> to vector<8x128xf32>
    %c1 = arith.constant 1 : index
    %c0_2 = arith.constant 0 : index
    %c0_3 = arith.constant 0 : index
    %2 = vector.load %arg2[%c1, %c0_2, %c0_3] : memref<2x8x128xf32, #tpu.memory_space<vmem>>, vector<1x8x128xf32>
    %3 = vector.shape_cast %2 : vector<1x8x128xf32> to vector<8x128xf32>
    %c16 = arith.constant 16 : index
    %4 = memref.load %arg1[%c16] : memref<17xf32, #tpu.memory_space<smem>>
    %5 = vector.broadcast %4 : f32 to vector<8x128xf32>
    %c0_4 = arith.constant 0 : index
    %6 = memref.load %arg1[%c0_4] : memref<17xf32, #tpu.memory_space<smem>>
    %7 = vector.broadcast %6 : f32 to vector<8x128xf32>
    %8 = arith.mulf %1, %7 : vector<8x128xf32>
    %c4 = arith.constant 4 : index
    %9 = memref.load %arg1[%c4] : memref<17xf32, #tpu.memory_space<smem>>
    %10 = vector.broadcast %9 : f32 to vector<8x128xf32>
    %11 = arith.mulf %3, %10 : vector<8x128xf32>
    %12 = arith.addf %8, %11 : vector<8x128xf32>
    %c8 = arith.constant 8 : index
    %13 = memref.load %arg1[%c8] : memref<17xf32, #tpu.memory_space<smem>>
    %14 = vector.broadcast %13 : f32 to vector<8x128xf32>
    %15 = arith.addf %12, %14 : vector<8x128xf32>
    %cst = arith.constant 0.000000e+00 : f32
    %16 = vector.broadcast %cst : f32 to vector<8x128xf32>
    %17 = arith.maximumf %15, %16 : vector<8x128xf32>
    %c12 = arith.constant 12 : index
    %18 = memref.load %arg1[%c12] : memref<17xf32, #tpu.memory_space<smem>>
    %19 = vector.broadcast %18 : f32 to vector<8x128xf32>
    %20 = arith.mulf %19, %17 : vector<8x128xf32>
    %21 = arith.addf %5, %20 : vector<8x128xf32>
    %c1_5 = arith.constant 1 : index
    %22 = memref.load %arg1[%c1_5] : memref<17xf32, #tpu.memory_space<smem>>
    %23 = vector.broadcast %22 : f32 to vector<8x128xf32>
    %24 = arith.mulf %1, %23 : vector<8x128xf32>
    %c5 = arith.constant 5 : index
    %25 = memref.load %arg1[%c5] : memref<17xf32, #tpu.memory_space<smem>>
    %26 = vector.broadcast %25 : f32 to vector<8x128xf32>
    %27 = arith.mulf %3, %26 : vector<8x128xf32>
    %28 = arith.addf %24, %27 : vector<8x128xf32>
    %c9 = arith.constant 9 : index
    %29 = memref.load %arg1[%c9] : memref<17xf32, #tpu.memory_space<smem>>
    %30 = vector.broadcast %29 : f32 to vector<8x128xf32>
    %31 = arith.addf %28, %30 : vector<8x128xf32>
    %cst_6 = arith.constant 0.000000e+00 : f32
    %32 = vector.broadcast %cst_6 : f32 to vector<8x128xf32>
    %33 = arith.maximumf %31, %32 : vector<8x128xf32>
    %c13 = arith.constant 13 : index
    %34 = memref.load %arg1[%c13] : memref<17xf32, #tpu.memory_space<smem>>
    %35 = vector.broadcast %34 : f32 to vector<8x128xf32>
    %36 = arith.mulf %35, %33 : vector<8x128xf32>
    %37 = arith.addf %21, %36 : vector<8x128xf32>
    %c2 = arith.constant 2 : index
    %38 = memref.load %arg1[%c2] : memref<17xf32, #tpu.memory_space<smem>>
    %39 = vector.broadcast %38 : f32 to vector<8x128xf32>
    %40 = arith.mulf %1, %39 : vector<8x128xf32>
    %c6 = arith.constant 6 : index
    %41 = memref.load %arg1[%c6] : memref<17xf32, #tpu.memory_space<smem>>
    %42 = vector.broadcast %41 : f32 to vector<8x128xf32>
    %43 = arith.mulf %3, %42 : vector<8x128xf32>
    %44 = arith.addf %40, %43 : vector<8x128xf32>
    %c10 = arith.constant 10 : index
    %45 = memref.load %arg1[%c10] : memref<17xf32, #tpu.memory_space<smem>>
    %46 = vector.broadcast %45 : f32 to vector<8x128xf32>
    %47 = arith.addf %44, %46 : vector<8x128xf32>
    %cst_7 = arith.constant 0.000000e+00 : f32
    %48 = vector.broadcast %cst_7 : f32 to vector<8x128xf32>
    %49 = arith.maximumf %47, %48 : vector<8x128xf32>
    %c14 = arith.constant 14 : index
    %50 = memref.load %arg1[%c14] : memref<17xf32, #tpu.memory_space<smem>>
    %51 = vector.broadcast %50 : f32 to vector<8x128xf32>
    %52 = arith.mulf %51, %49 : vector<8x128xf32>
    %53 = arith.addf %37, %52 : vector<8x128xf32>
    %c3 = arith.constant 3 : index
    %54 = memref.load %arg1[%c3] : memref<17xf32, #tpu.memory_space<smem>>
    %55 = vector.broadcast %54 : f32 to vector<8x128xf32>
    %56 = arith.mulf %1, %55 : vector<8x128xf32>
    %c7 = arith.constant 7 : index
    %57 = memref.load %arg1[%c7] : memref<17xf32, #tpu.memory_space<smem>>
    %58 = vector.broadcast %57 : f32 to vector<8x128xf32>
    %59 = arith.mulf %3, %58 : vector<8x128xf32>
    %60 = arith.addf %56, %59 : vector<8x128xf32>
    %c11 = arith.constant 11 : index
    %61 = memref.load %arg1[%c11] : memref<17xf32, #tpu.memory_space<smem>>
    %62 = vector.broadcast %61 : f32 to vector<8x128xf32>
    %63 = arith.addf %60, %62 : vector<8x128xf32>
    %cst_8 = arith.constant 0.000000e+00 : f32
    %64 = vector.broadcast %cst_8 : f32 to vector<8x128xf32>
    %65 = arith.maximumf %63, %64 : vector<8x128xf32>
    %c15 = arith.constant 15 : index
    %66 = memref.load %arg1[%c15] : memref<17xf32, #tpu.memory_space<smem>>
    %67 = vector.broadcast %66 : f32 to vector<8x128xf32>
    %68 = arith.mulf %67, %65 : vector<8x128xf32>
    %69 = arith.addf %53, %68 : vector<8x128xf32>
    %cst_9 = arith.constant 0.000000e+00 : f32
    %70 = vector.broadcast %cst_9 : f32 to vector<8x128xf32>
    %71 = arith.subf %70, %69 : vector<8x128xf32>
    %72 = math.exp %71 : vector<8x128xf32>
    %cst_10 = arith.constant 1.000000e+00 : f32
    %73 = vector.broadcast %cst_10 : f32 to vector<8x128xf32>
    %74 = arith.addf %73, %72 : vector<8x128xf32>
    %75 = tpu.reciprocal %74 {approx = true} : vector<8x128xf32> -> vector<8x128xf32>
    %c0_11 = arith.constant 0 : index
    %c0_12 = arith.constant 0 : index
    %76 = vector.load %arg3[%c0_11, %c0_12] : memref<8x128xf32, #tpu.memory_space<vmem>>, vector<8x128xf32>
    tpu.vector_store %arg3[%c0_11, %c0_12], %75 {strides = array<i32>} : memref<8x128xf32, #tpu.memory_space<vmem>>, vector<8x128xf32>,
    return
  }
  func.func @transform_0(%arg0: i32) -> i32 {
    %c0_i32 = arith.constant 0 : i32
    %c0_i32_0 = arith.constant 0 : i32
    return %c0_i32 : i32
  }
  func.func @transform_1(%arg0: i32) -> (i32, i32, i32) {
    %c0_i32 = arith.constant 0 : i32
    %c0_i32_0 = arith.constant 0 : i32
    %c0_i32_1 = arith.constant 0 : i32
    return %c0_i32, %arg0, %c0_i32_0 : i32, i32, i32
  }
  func.func @transform_2(%arg0: i32) -> (i32, i32) {
    %c0_i32 = arith.constant 0 : i32
    %c0_i32_0 = arith.constant 0 : i32
    return %arg0, %c0_i32 : i32, i32
  }
}

</mosaic_0001>

<llo_original>
// kernel: tpu_custom_call.1
$region0: #{tpu_custom_call.1}
  #allocation0 [shape = 'u32[]', space=smem, size = 0x4, offset = 0x4, fixed_abs, tag = 'smem constant byte address 0x4 - core index']
  #allocation1 [shape = 'u32[144,128]{1,0:T(1,128)}', space=vmem, size = 0x12000, scoped, tag = 'internal scratch']
  %s0 = inlined_call_operand.hbm [shape: f32[17], index: 0, kind: input, shape index: {}]
  %s1 = inlined_call_operand.hbm [shape: f32[2,8,128], index: 1, kind: input, shape index: {}]
  %s2 = inlined_call_operand.hbm [shape: f32[8,128], index: 2, kind: output, shape index: {}]
  %s3 = sld [smem:[#allocation0]]
  $region26: #{tpu_custom_call.1} parent=0
    _
  %s5 = ssub.s32 1, %s3
  %s6 = scalar_select 0, %s5, %s3
  $region1: #{tpu_custom_call.1} parent=0
    #allocation2 [shape = 'u8[512]{0}', space=smem, size = 0x200, scoped, tag = 'input window, operand 0, single buffered']
    #allocation3 [shape = 's32[1]{0}', space=sflag, size = 0x4, scoped, tag = 'scoped memory for tpu_custom_call.1']
    #allocation4 [shape = 's32[1]{0}', space=sflag, size = 0x4, scoped, tag = 'scoped memory for tpu_custom_call.1']
    #allocation5 [shape = 's32[1]{0}', space=sflag, size = 0x4, scoped, tag = 'scoped memory for tpu_custom_call.1']
    #allocation6 [shape = 'u8[8192]{0}', space=vmem, size = 0x2000, scoped, tag = 'input window, operand 1, single buffered']
    #allocation7 [shape = 'u8[4096]{0}', space=vmem, size = 0x1000, scoped, tag = 'output window, operand 0, single buffered']
    %7 = vsyncpa [#allocation5], 0
    %8 = vsyncpa [#allocation3], 0
    %9 = vsyncpa [#allocation4], 0
    // Predicated region
    $region2: #{tpu_custom_call.1} parent=1 // pred_check
      _
    $region3: #{tpu_custom_call.1} parent=1 // pred_check_branch
      %11 = sbr.rel (0) target = $region5
    $region4: #{tpu_custom_call.1} parent=1 // pred_region
      %s13 = ssub.s32 16, 16
      %14 = vsyncadd [#allocation5], %s13
      %17 = dma.hbm_to_smem %s0, 16, [#allocation2], [#allocation5]
    $region5: #{tpu_custom_call.1} parent=1 // pred_fallthru
      _
    // Predicated region
    $region6: #{tpu_custom_call.1} parent=1 // pred_check
      _
    $region7: #{tpu_custom_call.1} parent=1 // pred_check_branch
      %19 = sbr.rel (0) target = $region9
    $region8: #{tpu_custom_call.1} parent=1 // pred_region
      %s21 = ssub.s32 256, 256
      %22 = vsyncadd [#allocation3], %s21
      %s23 = sshll.u32 [#allocation6], 4
      %s24 = int_to_ptr.vmem [resolvable:$true] %s23
      %29 = dma.hbm_to_vmem [thread:$0]  %s1, 256, %s24, [#allocation3], 128, 128, 8
    $region9: #{tpu_custom_call.1} parent=1 // pred_fallthru
      _
    // Predicated region
    $region10: #{tpu_custom_call.1} parent=1 // pred_check
      _
    $region11: #{tpu_custom_call.1} parent=1 // pred_check_branch
      %31 = sbr.rel (0) target = $region13
    $region12: #{tpu_custom_call.1} parent=1 // pred_region
      %32 = dma.done [#allocation5], 16
    $region13: #{tpu_custom_call.1} parent=1 // pred_fallthru
      _
    // Predicated region
    $region14: #{tpu_custom_call.1} parent=1 // pred_check
      _
    $region15: #{tpu_custom_call.1} parent=1 // pred_check_branch
      %34 = sbr.rel (0) target = $region17
    $region16: #{tpu_custom_call.1} parent=1 // pred_region
      %35 = dma.done [#allocation3], 256
    $region17: #{tpu_custom_call.1} parent=1 // pred_fallthru
      _
    %36 = sfence
    %v37 = vld [vmem:[#allocation6] sm:$0xff]
    %s38 = scalar_lea.vmem [#allocation6], 8
    %v39 = vld [vmem:[%s38] sm:$0xff]
    %s40 = sld [smem:[#allocation2 + $0x10]]
    %v41 = vstv %s40
    %s42 = sld [smem:[#allocation2]]
    %v43 = vstv %s42
    %v44 = vmul.f32 %v37, %v43
    %s45 = sld [smem:[#allocation2 + $0x4]]
    %v46 = vstv %s45
    %v47 = vmul.f32 %v39, %v46
    %v48 = vadd.f32 %v44, %v47
    %s49 = sld [smem:[#allocation2 + $0x8]]
    %v50 = vstv %s49
    %v51 = vadd.f32 %v48, %v50
    %v52 = vmax.f32 %v51, 0.0
    %s53 = sld [smem:[#allocation2 + $0xc]]
    %v54 = vstv %s53
    %v55 = vmul.f32 %v54, %v52
    %v56 = vadd.f32 %v41, %v55
    %s57 = sld [smem:[#allocation2 + $0x1]]
    %v58 = vstv %s57
    %v59 = vmul.f32 %v37, %v58
    %s60 = sld [smem:[#allocation2 + $0x5]]
    %v61 = vstv %s60
    %v62 = vmul.f32 %v39, %v61
    %v63 = vadd.f32 %v59, %v62
    %s64 = sld [smem:[#allocation2 + $0x9]]
    %v65 = vstv %s64
    %v66 = vadd.f32 %v63, %v65
    %v67 = vmax.f32 %v66, 0.0
    %s68 = sld [smem:[#allocation2 + $0xd]]
    %v69 = vstv %s68
    %v70 = vmul.f32 %v69, %v67
    %v71 = vadd.f32 %v56, %v70
    %s72 = sld [smem:[#allocation2 + $0x2]]
    %v73 = vstv %s72
    %v74 = vmul.f32 %v37, %v73
    %s75 = sld [smem:[#allocation2 + $0x6]]
    %v76 = vstv %s75
    %v77 = vmul.f32 %v39, %v76
    %v78 = vadd.f32 %v74, %v77
    %s79 = sld [smem:[#allocation2 + $0xa]]
    %v80 = vstv %s79
    %v81 = vadd.f32 %v78, %v80
    %v82 = vmax.f32 %v81, 0.0
    %s83 = sld [smem:[#allocation2 + $0xe]]
    %v84 = vstv %s83
    %v85 = vmul.f32 %v84, %v82
    %v86 = vadd.f32 %v71, %v85
    %s87 = sld [smem:[#allocation2 + $0x3]]
    %v88 = vstv %s87
    %v89 = vmul.f32 %v37, %v88
    %s90 = sld [smem:[#allocation2 + $0x7]]
    %v91 = vstv %s90
    %v92 = vmul.f32 %v39, %v91
    %v93 = vadd.f32 %v89, %v92
    %s94 = sld [smem:[#allocation2 + $0xb]]
    %v95 = vstv %s94
    %v96 = vadd.f32 %v93, %v95
    %v97 = vmax.f32 %v96, 0.0
    %s98 = sld [smem:[#allocation2 + $0xf]]
    %v99 = vstv %s98
    %v100 = vmul.f32 %v99, %v97
    %v101 = vadd.f32 %v86, %v100
    %v102 = vsub.f32 0.0, %v101
    %v103 = vmul.f32 %v102, 1.442695
    %v104 = vpow.pop %v103
    %v105 = vadd.f32 %v104, 1.0
    %v106 = vrcp.pop %v105
    %107 = vst [vmem:[#allocation7] sm:$0xff] %v106
    // Predicated region
    $region18: #{tpu_custom_call.1} parent=1 // pred_check
      _
    $region19: #{tpu_custom_call.1} parent=1 // pred_check_branch
      %109 = sbr.rel (0) target = $region21
    $region20: #{tpu_custom_call.1} parent=1 // pred_region
      %s111 = ssub.s32 128, 128
      %112 = vsyncadd [#allocation4], %s111
      %s114 = sshll.u32 [#allocation7], 4
      %s115 = int_to_ptr.vmem [resolvable:$true] %s114
      %117 = dma.vmem_to_hbm [thread:$0]  %s115, 128, %s2, [#allocation4]
    $region21: #{tpu_custom_call.1} parent=1 // pred_fallthru
      _
    // Predicated region
    $region22: #{tpu_custom_call.1} parent=1 // pred_check
      _
    $region23: #{tpu_custom_call.1} parent=1 // pred_check_branch
      %119 = sbr.rel (0) target = $region25
    $region24: #{tpu_custom_call.1} parent=1 // pred_region
      %120 = dma.done [#allocation4], 128
    $region25: #{tpu_custom_call.1} parent=1 // pred_fallthru
      _
    %121 = vsyncpa [#allocation3], 1
    %122 = vsyncpa [#allocation4], 1
    %123 = vsyncpa [#allocation5], 1

</llo_original>
